<compile_context>
chip_gen: v7x
topology: tpu7x:2x2x1
jax: 0.10.0
libtpu: 0.0.40
codegen_flags: <defaults>
</compile_context>

<pallas_src>
import jax
import jax.numpy as jnp
from jax.experimental import pallas as pl
from jax.experimental.pallas import tpu as pltpu


def _vmem_capacity_bytes():
    """Physical VMEM per TensorCore; conservative fallback = v7x (64 MiB)."""
    try:
        info = pltpu.get_tpu_info()
        cap = getattr(info, "vmem_capacity_bytes", None)
        if cap:
            return int(cap)
    except Exception:
        pass
    return 64 * 1024 * 1024


def _choose_tile(L, HW, itemsize, *, max_tile=None, slab_fraction=0.5):
    """Largest multiple-of-128 spatial tile whose double-buffered (1, L, T)
    x slab stays inside `slab_fraction` of this chip's physical VMEM.
    Returns (tile, vmem_limit_bytes)."""
    cap = _vmem_capacity_bytes()
    slab_budget = int(cap * slab_fraction)
    hw_padded = pl.cdiv(HW, 128) * 128
    fit = slab_budget // (2 * L * itemsize)            # 2 = double buffer
    fit = max(128, (fit // 128) * 128)
    tile = min(hw_padded, fit)
    if max_tile is not None:
        tile = min(tile, max(128, (max_tile // 128) * 128))
    tile = max(128, tile)
    # Scoped-VMEM limit: x slab + a few MiB for weights/outputs/padding.
    slab_bytes = 2 * L * tile * itemsize
    vmem_limit = max(16 << 20, min(int(cap * 0.9), slab_bytes + (4 << 20)))
    return tile, vmem_limit


def _make_isam_kernel(hw_total, tile, L, D, needs_mask):
    """Builds the kernel with sizes baked in (tile, L, D are static)."""
    inv_hw = 1.0 / float(hw_total)

    def _accum(x_ref, pooled_ref, mask_tail, s):
        x = x_ref[...].astype(jnp.float32)                     # (1, L, T)
        if mask_tail:
            # Tail tile may extend past H*W; zero the padded lanes so they
            # don't corrupt the mean. (1,1,T) iota broadcasts over (1,L,T).
            offs = s * tile + jax.lax.broadcasted_iota(jnp.int32, (1, 1, tile), 2)
            x = jnp.where(offs < hw_total, x, 0.0)
        pooled_ref[...] += jnp.sum(x, axis=-1)[:, None, :]     # (1, 1, L)

    def kernel(x_ref, wab_ref, bab_ref, wc_ref, bc_ref, pooled_ref, logits_ref):
        s = pl.program_id(1)
        last = pl.num_programs(1) - 1

        # Zero the resident pooled-sum output block on the first spatial tile.
        @pl.when(s == 0)
        def _():
            pooled_ref[...] = jnp.zeros_like(pooled_ref)

        # Hot loop: pure load + add (HBM-bandwidth bound). Masking only on the
        # last (possibly ragged) tile, and only if masking is needed at all.
        if needs_mask:
            @pl.when(s < last)
            def _():
                _accum(x_ref, pooled_ref, False, s)

            @pl.when(s == last)
            def _():
                _accum(x_ref, pooled_ref, True, s)
        else:
            _accum(x_ref, pooled_ref, False, s)

        # One-shot epilogue on the last spatial tile for this batch row:
        # mean + fused tanh/sigmoid branches + gate + final Linear(D, n_cls).
        @pl.when(s == last)
        def _():
            pooled = pooled_ref[...] * inv_hw                  # (1, 1, L) mean
            pooled_ref[...] = pooled
            p = pooled.reshape(1, L)
            # attention_a | attention_b fused into a single (L, 2D) matmul.
            ab = jnp.dot(p, wab_ref[...],
                         preferred_element_type=jnp.float32) + bab_ref[...]
            a = jnp.tanh(ab[:, :D])                            # Dropout = identity (eval)
            b = jax.nn.sigmoid(ab[:, D:])
            logits = jnp.dot(a * b, wc_ref[...],
                             preferred_element_type=jnp.float32) + bc_ref[...]
            logits_ref[...] = logits[:, None, :]

    return kernel


def isam_forward(x, params, *, training=False, batch_size=None,
                 max_tile=None, slab_fraction=0.5):
    """x: (B, L, H, W).  Returns (A, x_pooled, x) like ISAM.forward (eval)."""
    B, L, H, W = x.shape
    wa, ba, wb, bb, wc, bc = params
    D = wa.shape[1]
    n_classes = wc.shape[1]
    HW = H * W

    x_flat = x.reshape(B, L, HW)
    # Fuse attention_a / attention_b weights -> one epilogue matmul.
    wab = jnp.concatenate([wa, wb], axis=1)                    # (L, 2D)
    bab = jnp.concatenate([ba, bb], axis=1)                    # (1, 2D)

    itemsize = jnp.dtype(x.dtype).itemsize
    T, vmem_limit = _choose_tile(L, HW, itemsize,
                                 max_tile=max_tile, slab_fraction=slab_fraction)
    num_tiles = pl.cdiv(HW, T)
    needs_mask = (num_tiles * T) != HW

    kernel = _make_isam_kernel(HW, T, L, D, needs_mask)

    pooled3, logits3 = pl.pallas_call(
        kernel,
        out_shape=(
            jax.ShapeDtypeStruct((B, 1, L), jnp.float32),
            jax.ShapeDtypeStruct((B, 1, n_classes), jnp.float32),
        ),
        grid_spec=pltpu.PrefetchScalarGridSpec(
            num_scalar_prefetch=0,
            grid=(B, num_tiles),
            in_specs=[
                # x streamed per batch row over the spatial axis
                # (double-buffered by Pallas).
                pl.BlockSpec((1, L, T), lambda b, s: (b, 0, s)),
                # Weights / biases resident across the whole grid.
                pl.BlockSpec((L, 2 * D), lambda b, s: (0, 0)),
                pl.BlockSpec((1, 2 * D), lambda b, s: (0, 0)),
                pl.BlockSpec((D, n_classes), lambda b, s: (0, 0)),
                pl.BlockSpec((1, n_classes), lambda b, s: (0, 0)),
            ],
            out_specs=(
                # Constant index over the spatial axis -> resident accumulator.
                pl.BlockSpec((1, 1, L), lambda b, s: (b, 0, 0)),
                pl.BlockSpec((1, 1, n_classes), lambda b, s: (b, 0, 0)),
            ),
        ),
        compiler_params=pltpu.CompilerParams(
            # batch axis parallel (uses both TCs on v7x), spatial = reduction.
            dimension_semantics=("parallel", "arbitrary"),
            vmem_limit_bytes=vmem_limit,
        ),
    )(x_flat, wab, bab, wc, bc)

    pooled = pooled3.reshape(B, L)
    logits = logits3.reshape(B, n_classes)

    # Matches: A = A.view(1, 1, -1) in eval / A.view(batch_size, 1, -1) in train.
    if not training:
        A = logits.reshape(1, 1, -1)
    else:
        A = logits.reshape(batch_size, 1, -1)
    return A, pooled, x


def init_params(key, L, D, n_classes=1):
    """Deterministic synthetic init (same shapes as the nn.Linear layers)."""
    k = jax.random.split(key, 6)
    # Weights stored already-transposed as (in, out) so the kernel can do x @ W.
    wa = jax.random.uniform(k[0], (L, D), jnp.float32, -1.0, 1.0) / jnp.sqrt(L)
    ba = jax.random.uniform(k[1], (1, D), jnp.float32, -1.0, 1.0) / jnp.sqrt(L)
    wb = jax.random.uniform(k[2], (L, D), jnp.float32, -1.0, 1.0) / jnp.sqrt(L)
    bb = jax.random.uniform(k[3], (1, D), jnp.float32, -1.0, 1.0) / jnp.sqrt(L)
    wc = jax.random.uniform(k[4], (D, n_classes), jnp.float32, -1.0, 1.0) / jnp.sqrt(D)
    bc = jax.random.uniform(k[5], (1, n_classes), jnp.float32, -1.0, 1.0) / jnp.sqrt(D)
    return wa, ba, wb, bb, wc, bc


def _reference(x, params):
    """Plain-JAX reference for a sanity check."""
    wa, ba, wb, bb, wc, bc = params
    pooled = jnp.mean(x, axis=(2, 3))
    a = jnp.tanh(pooled @ wa + ba)
    b = jax.nn.sigmoid(pooled @ wb + bb)
    logits = (a * b) @ wc + bc
    return logits.reshape(1, 1, -1), pooled


if __name__ == "__main__":
    # Shapes consistent with the module: B=2, channels L=16, spatial 16x16,
    # hidden D=32, n_classes=1.
    B, L, H, W = 2, 16, 16, 16
    D, n_classes = 32, 1

    key = jax.random.PRNGKey(0)
    kx, kp, kx2 = jax.random.split(key, 3)
    x = jax.random.normal(kx, (B, L, H, W), jnp.float32)
    params = init_params(kp, L, D, n_classes)

    # Case 1: spatial size fits one tile (single spatial grid step, no mask).
    A, x_pooled, x_out = isam_forward(x, params, training=False)
    jax.block_until_ready((A, x_pooled, x_out))

    A_ref, pooled_ref = _reference(x, params)
    assert A.shape == (1, 1, B * n_classes)
    assert x_pooled.shape == (B, L)
    assert x_out.shape == (B, L, H, W)
    assert jnp.allclose(A, A_ref, atol=1e-5), "logits mismatch"
    assert jnp.allclose(x_pooled, pooled_ref, atol=1e-5), "pooled mismatch"

    # Case 2: ragged spatial size (H*W=289) with a forced small tile (T=128)
    # to exercise the multi-step grid, resident accumulator, and tail masking.
    H2 = W2 = 17
    x2 = jax.random.normal(kx2, (B, L, H2, W2), jnp.float32)
    A2, pooled2, _ = isam_forward(x2, params, training=False, max_tile=128)
    jax.block_until_ready((A2, pooled2))
    A2_ref, pooled2_ref = _reference(x2, params)
    assert jnp.allclose(A2, A2_ref, atol=1e-5), "ragged logits mismatch"
    assert jnp.allclose(pooled2, pooled2_ref, atol=1e-5), "ragged pooled mismatch"

    # TODO(synk): training-mode Dropout(0.25) not implemented (eval-mode identity).
    print("KERNEL_OK")
</pallas_src>

<mosaic_0001>
module attributes {stable_mosaic.version = 11 : i64} {
  func.func @kernel(%arg0: i32, %arg1: i32, %arg2: memref<1x16x256xf32, #tpu.memory_space<vmem>>, %arg3: memref<16x64xf32, #tpu.memory_space<vmem>>, %arg4: memref<1x64xf32, #tpu.memory_space<vmem>>, %arg5: memref<32x1xf32, #tpu.memory_space<vmem>>, %arg6: memref<1x1xf32, #tpu.memory_space<vmem>>, %arg7: memref<1x1x16xf32, #tpu.memory_space<vmem>>, %arg8: memref<1x1x1xf32, #tpu.memory_space<vmem>>) attributes {dimension_semantics = [#tpu.dimension_semantics<parallel>, #tpu.dimension_semantics<arbitrary>], iteration_bounds = array<i64: 2, 1>, scalar_prefetch = 0 : i64, scratch_operands = 0 : i64, tpu.core_type = #tpu.core_type<tc>, window_params = [{transform_indices = @transform_0, window_bounds = array<i64: 1, 16, 256>}, {pipeline_mode = #tpu.pipeline_mode<synchronous>, transform_indices = @transform_1, window_bounds = array<i64: 16, 64>}, {pipeline_mode = #tpu.pipeline_mode<synchronous>, transform_indices = @transform_2, window_bounds = array<i64: 1, 64>}, {pipeline_mode = #tpu.pipeline_mode<synchronous>, transform_indices = @transform_3, window_bounds = array<i64: 32, 1>}, {pipeline_mode = #tpu.pipeline_mode<synchronous>, transform_indices = @transform_4, window_bounds = array<i64: 1, 1>}, {transform_indices = @transform_5, window_bounds = array<i64: 1, 1, 16>}, {transform_indices = @transform_6, window_bounds = array<i64: 1, 1, 1>}]} {
    %c0_i32 = arith.constant 0 : i32
    %0 = arith.cmpi eq, %arg1, %c0_i32 : i32
    %1 = arith.extui %0 : i1 to i32
    %c0_i32_0 = arith.constant 0 : i32
    %2 = arith.cmpi ne, %1, %c0_i32_0 : i32
    scf.if %2 {
      %cst_11 = arith.constant 0.000000e+00 : f32
      %12 = vector.broadcast %cst_11 : f32 to vector<1x1x16xf32>
      %c0_12 = arith.constant 0 : index
      %c0_13 = arith.constant 0 : index
      %c0_14 = arith.constant 0 : index
      %13 = vector.load %arg7[%c0_12, %c0_13, %c0_14] : memref<1x1x16xf32, #tpu.memory_space<vmem>>, vector<1x1x16xf32>
      tpu.vector_store %arg7[%c0_12, %c0_13, %c0_14], %12 {strides = array<i32>} : memref<1x1x16xf32, #tpu.memory_space<vmem>>, vector<1x1x16xf32>,
    } else {
    }
    %c0 = arith.constant 0 : index
    %c0_1 = arith.constant 0 : index
    %c0_2 = arith.constant 0 : index
    %3 = vector.load %arg2[%c0, %c0_1, %c0_2] : memref<1x16x256xf32, #tpu.memory_space<vmem>>, vector<1x16x256xf32>
    %c0_3 = arith.constant 0 : index
    %c0_4 = arith.constant 0 : index
    %c0_5 = arith.constant 0 : index
    %4 = vector.load %arg7[%c0_3, %c0_4, %c0_5] : memref<1x1x16xf32, #tpu.memory_space<vmem>>, vector<1x1x16xf32>
    %cst = arith.constant dense<0.000000e+00> : vector<1x16xf32>
    %5 = vector.multi_reduction <add>, %3, %cst [2] : vector<1x16x256xf32> to vector<1x16xf32>
    %6 = vector.shape_cast %5 : vector<1x16xf32> to vector<1x1x16xf32>
    %7 = arith.addf %4, %6 : vector<1x1x16xf32>
    %c0_6 = arith.constant 0 : index
    %c0_7 = arith.constant 0 : index
    %c0_8 = arith.constant 0 : index
    %8 = vector.load %arg7[%c0_6, %c0_7, %c0_8] : memref<1x1x16xf32, #tpu.memory_space<vmem>>, vector<1x1x16xf32>
    tpu.vector_store %arg7[%c0_6, %c0_7, %c0_8], %7 {strides = array<i32>} : memref<1x1x16xf32, #tpu.memory_space<vmem>>, vector<1x1x16xf32>,
    %c0_i32_9 = arith.constant 0 : i32
    %9 = arith.cmpi eq, %arg1, %c0_i32_9 : i32
    %10 = arith.extui %9 : i1 to i32
    %c0_i32_10 = arith.constant 0 : i32
    %11 = arith.cmpi ne, %10, %c0_i32_10 : i32
    scf.if %11 {
      %c0_11 = arith.constant 0 : index
      %c0_12 = arith.constant 0 : index
      %c0_13 = arith.constant 0 : index
      %12 = vector.load %arg7[%c0_11, %c0_12, %c0_13] : memref<1x1x16xf32, #tpu.memory_space<vmem>>, vector<1x1x16xf32>
      %cst_14 = arith.constant 3.906250e-03 : f32
      %13 = vector.broadcast %cst_14 : f32 to vector<1x1x16xf32>
      %14 = arith.mulf %12, %13 : vector<1x1x16xf32>
      %c0_15 = arith.constant 0 : index
      %c0_16 = arith.constant 0 : index
      %c0_17 = arith.constant 0 : index
      %15 = vector.load %arg7[%c0_15, %c0_16, %c0_17] : memref<1x1x16xf32, #tpu.memory_space<vmem>>, vector<1x1x16xf32>
      tpu.vector_store %arg7[%c0_15, %c0_16, %c0_17], %14 {strides = array<i32>} : memref<1x1x16xf32, #tpu.memory_space<vmem>>, vector<1x1x16xf32>,
      %16 = vector.shape_cast %14 : vector<1x1x16xf32> to vector<1x16xf32>
      %c0_18 = arith.constant 0 : index
      %c0_19 = arith.constant 0 : index
      %17 = vector.load %arg3[%c0_18, %c0_19] : memref<16x64xf32, #tpu.memory_space<vmem>>, vector<16x64xf32>
      %cst_20 = arith.constant dense<0.000000e+00> : vector<1x64xf32>
      %18 = tpu.matmul %16, %17, %cst_20 {dimension_numbers = #tpu.dot_dimension_numbers<[1], [0], [0], [1], [0, 0, 1, 1], [], []>} : vector<1x16xf32>, vector<16x64xf32>, vector<1x64xf32> -> vector<1x64xf32>
      %c0_21 = arith.constant 0 : index
      %c0_22 = arith.constant 0 : index
      %19 = vector.load %arg4[%c0_21, %c0_22] : memref<1x64xf32, #tpu.memory_space<vmem>>, vector<1x64xf32>
      %20 = arith.addf %18, %19 : vector<1x64xf32>
      %21 = vector.extract_strided_slice %20 {offsets = [0, 0], sizes = [1, 32], strides = [1, 1]} : vector<1x64xf32> to vector<1x32xf32>
      %22 = math.tanh %21 : vector<1x32xf32>
      %23 = vector.extract_strided_slice %20 {offsets = [0, 32], sizes = [1, 32], strides = [1, 1]} : vector<1x64xf32> to vector<1x32xf32>
      %24 = arith.negf %23 : vector<1x32xf32>
      %25 = math.exp %24 : vector<1x32xf32>
      %cst_23 = arith.constant 1.000000e+00 : f32
      %26 = vector.broadcast %cst_23 : f32 to vector<1x32xf32>
      %27 = arith.addf %26, %25 : vector<1x32xf32>
      %28 = arith.divf %26, %27 : vector<1x32xf32>
      %29 = arith.mulf %22, %28 : vector<1x32xf32>
      %c0_24 = arith.constant 0 : index
      %c0_25 = arith.constant 0 : index
      %30 = vector.load %arg5[%c0_24, %c0_25] : memref<32x1xf32, #tpu.memory_space<vmem>>, vector<32x1xf32>
      %cst_26 = arith.constant dense<0.000000e+00> : vector<1x1xf32>
      %31 = tpu.matmul %29, %30, %cst_26 {dimension_numbers = #tpu.dot_dimension_numbers<[1], [0], [0], [1], [0, 0, 1, 1], [], []>} : vector<1x32xf32>, vector<32x1xf32>, vector<1x1xf32> -> vector<1x1xf32>
      %c0_27 = arith.constant 0 : index
      %c0_28 = arith.constant 0 : index
      %32 = vector.load %arg6[%c0_27, %c0_28] : memref<1x1xf32, #tpu.memory_space<vmem>>, vector<1x1xf32>
      %33 = arith.addf %31, %32 : vector<1x1xf32>
      %34 = vector.shape_cast %33 : vector<1x1xf32> to vector<1x1x1xf32>
      %c0_29 = arith.constant 0 : index
      %c0_30 = arith.constant 0 : index
      %c0_31 = arith.constant 0 : index
      %35 = vector.load %arg8[%c0_29, %c0_30, %c0_31] : memref<1x1x1xf32, #tpu.memory_space<vmem>>, vector<1x1x1xf32>
      tpu.vector_store %arg8[%c0_29, %c0_30, %c0_31], %34 {strides = array<i32>} : memref<1x1x1xf32, #tpu.memory_space<vmem>>, vector<1x1x1xf32>,
    } else {
    }
    return
  }
  func.func @transform_0(%arg0: i32, %arg1: i32) -> (i32, i32, i32) {
    %c0_i32 = arith.constant 0 : i32
    %c0_i32_0 = arith.constant 0 : i32
    return %arg0, %c0_i32, %arg1 : i32, i32, i32
  }
  func.func @transform_1(%arg0: i32, %arg1: i32) -> (i32, i32) {
    %c0_i32 = arith.constant 0 : i32
    %c0_i32_0 = arith.constant 0 : i32
    %c0_i32_1 = arith.constant 0 : i32
    return %c0_i32, %c0_i32_0 : i32, i32
  }
  func.func @transform_2(%arg0: i32, %arg1: i32) -> (i32, i32) {
    %c0_i32 = arith.constant 0 : i32
    %c0_i32_0 = arith.constant 0 : i32
    %c0_i32_1 = arith.constant 0 : i32
    return %c0_i32, %c0_i32_0 : i32, i32
  }
  func.func @transform_3(%arg0: i32, %arg1: i32) -> (i32, i32) {
    %c0_i32 = arith.constant 0 : i32
    %c0_i32_0 = arith.constant 0 : i32
    %c0_i32_1 = arith.constant 0 : i32
    return %c0_i32, %c0_i32_0 : i32, i32
  }
  func.func @transform_4(%arg0: i32, %arg1: i32) -> (i32, i32) {
    %c0_i32 = arith.constant 0 : i32
    %c0_i32_0 = arith.constant 0 : i32
    %c0_i32_1 = arith.constant 0 : i32
    return %c0_i32, %c0_i32_0 : i32, i32
  }
  func.func @transform_5(%arg0: i32, %arg1: i32) -> (i32, i32, i32) {
    %c0_i32 = arith.constant 0 : i32
    %c0_i32_0 = arith.constant 0 : i32
    %c0_i32_1 = arith.constant 0 : i32
    return %arg0, %c0_i32, %c0_i32_0 : i32, i32, i32
  }
  func.func @transform_6(%arg0: i32, %arg1: i32) -> (i32, i32, i32) {
    %c0_i32 = arith.constant 0 : i32
    %c0_i32_0 = arith.constant 0 : i32
    %c0_i32_1 = arith.constant 0 : i32
    return %arg0, %c0_i32, %c0_i32_0 : i32, i32, i32
  }
}

</mosaic_0001>

<llo_original>
// kernel: tpu_custom_call.1
$region0: #{tpu_custom_call.1}
  #allocation0 [shape = 'u32[]', space=smem, size = 0x4, offset = 0x4, fixed_abs, tag = 'smem constant byte address 0x4 - core index']
  #allocation1 [shape = 'u32[144,128]{1,0:T(1,128)}', space=vmem, size = 0x12000, scoped, tag = 'internal scratch']
  #allocation2 [shape = 'f32[1,1]{1,0:T(1,128)S(1)}', space=vmem, size = 0x200, scoped, tag = 'scoped memory for tpu_custom_call.1']
  %s0 = inlined_call_operand.hbm [shape: f32[2,16,256], index: 0, kind: input, shape index: {}]
  %s1 = inlined_call_operand.vmem [shape: f32[16,64], index: 1, kind: input, shape index: {}]
  %s2 = inlined_call_operand.vmem [shape: f32[1,64], index: 2, kind: input, shape index: {}]
  %s3 = inlined_call_operand.vmem [shape: f32[32,1], index: 3, kind: input, shape index: {}]
  %s4 = inlined_call_operand.<no memory space> [shape: f32[1,1], index: 4, kind: input, shape index: {}]
  %s5 = inlined_call_operand.hbm [shape: f32[2,1,16], index: 5, kind: output, shape index: {0}]
  %s6 = inlined_call_operand.vmem [shape: f32[2,1,1], index: 6, kind: output, shape index: {1}]
  %7 = xla_tuple %s5, %s6
  %s8 = sld [smem:[#allocation0]]
  $region73: #{tpu_custom_call.1} parent=0
    _
  %s10 = ssub.s32 1, %s8
  %s11 = scalar_select 0, %s10, %s8
  %v12 = vstv %s4
  %13 = vst [vmem:[#allocation2] sm:$0x1] %v12
  $region1: #{tpu_custom_call.1} parent=0
    #allocation3 [shape = 'u8[32768]{0}', space=vmem, size = 0x8000, scoped, tag = 'input window, operand 0']
    #allocation4 [shape = 's32[2]{0}', space=sflag, size = 0x8, scoped, tag = 'scoped memory for tpu_custom_call.1']
    #allocation5 [shape = 's32[2]{0}', space=sflag, size = 0x8, scoped, tag = 'scoped memory for tpu_custom_call.1']
    #allocation6 [shape = 'u8[1024]{0}', space=vmem, size = 0x400, scoped, tag = 'output window, operand 0']
    %14 = vsyncpa [#allocation4], 0
    %s15 = scalar_lea.sflag [#allocation4], 1
    %16 = vsyncpa %s15, 0
    %17 = vsyncpa [#allocation5], 0
    %s18 = scalar_lea.sflag [#allocation5], 1
    %19 = vsyncpa %s18, 0
    loop: start=0, step=1, limit=4
    $region2: #{tpu_custom_call.1} parent=1 // loop_pre_header
      _
    $region3: #{tpu_custom_call.1} parent=1 // loop_header
      %s21 = sphi 0, %s25
      %p22 = scmp.ge.s32.totalorder %s21, 4
      %s28 = sphi 0, %s40
      %s29 = sphi 0, %s36
      %s30 = sphi 0, %s28
      %s31 = sphi 0, %s29
      %s32 = sphi 0, %s30
      %s33 = sphi 0, %s31
      %s45 = sphi 0, %s47
      %s48 = sphi 0, %s45
      %s49 = sphi 0, %s48
      %s65 = sphi 0, %s49
      %s69 = sphi 0, %s69
      %s71 = sphi 0, %s69
      %s72 = sphi 0, %s71
      %s86 = sphi 0, %s72
      %s90 = sphi 0, %s90
      %s92 = sphi 0, %s90
      %s93 = sphi 0, %s92
      %s107 = sphi 0, %s93
      %s111 = sphi 0, %s111
      %s113 = sphi 0, %s111
      %s114 = sphi 0, %s113
      %s128 = sphi 0, %s114
      %s132 = sphi 0, %s132
      %s134 = sphi 0, %s132
      %s135 = sphi 0, %s134
      %s149 = sphi 0, %s135
      %s155 = sphi 0, %s157
      %s158 = sphi 0, %s155
      %s159 = sphi 0, %s158
      %s175 = sphi 0, %s159
      %s181 = sphi 0, %s183
      %s184 = sphi 0, %s181
      %s185 = sphi 0, %s184
      %s201 = sphi 0, %s185
    $region4: #{tpu_custom_call.1} parent=1 // loop_header_branch
      %24 = sbr.rel (%p22) target = $region8
    $region5: #{tpu_custom_call.1} parent=1 // loop_body
      %s26 = ssub.s32 %s21, 1
      %s27 = ssub.s32 %s21, 2
      %s34 = sadd.s32 1, %s29
      %p35 = scmp.ge.s32.totalorder %s34, 1
      %s36 = scalar_select %p35, 0, %s34
      %s37 = sadd.s32 1, %s28
      %s38 = scalar_select %p35, %s37, %s28
      %p39 = scmp.ge.s32.totalorder %s38, 2
      %s40 = scalar_select %p39, 0, %s38
      %s41 = ssub.s32 %s28, %s40
      %s42 = ssub.s32 %s29, %s36
      %s43 = sor.u32 %s41, %s42
      %p44 = scmp.eq.s32.totalorder %s43, 0
      %s46 = sadd.s32 %s45, 1
      %s47 = scalar_select %p44, %s45, %s46
      %p50 = pneg %p44
      %p51 = scmp.eq.s32.totalorder %s21, 1
      %p52 = por %p50, %p51
      %p53 = scmp.ne.s32.totalorder %s45, %s48
      %p54 = scmp.eq.s32.totalorder %s21, 0
      %p55 = por %p53, %p54
      %p56 = scmp.ne.s32.totalorder %s45, %s48
      %p57 = scmp.eq.s32.totalorder %s26, 1
      %p58 = por %p56, %p57
      %p59 = scmp.ne.s32.totalorder %s48, %s49
      %p60 = scmp.eq.s32.totalorder %s26, 0
      %p61 = por %p59, %p60
      %p62 = scmp.ne.s32.totalorder %s48, %s49
      %p63 = scmp.eq.s32.totalorder %s27, 1
      %p64 = por %p62, %p63
      %p66 = scmp.ne.s32.totalorder %s49, %s65
      %p67 = scmp.eq.s32.totalorder %s27, 0
      %p68 = por %p66, %p67
      %s70 = sadd.s32 %s69, 1
      %p73 = scmp.eq.s32.totalorder %s21, 1
      %p74 = scmp.ne.s32.totalorder %s69, %s71
      %p75 = scmp.eq.s32.totalorder %s21, 0
      %p76 = por %p74, %p75
      %p77 = scmp.ne.s32.totalorder %s69, %s71
      %p78 = scmp.eq.s32.totalorder %s26, 1
      %p79 = por %p77, %p78
      %p80 = scmp.ne.s32.totalorder %s71, %s72
      %p81 = scmp.eq.s32.totalorder %s26, 0
      %p82 = por %p80, %p81
      %p83 = scmp.ne.s32.totalorder %s71, %s72
      %p84 = scmp.eq.s32.totalorder %s27, 1
      %p85 = por %p83, %p84
      %p87 = scmp.ne.s32.totalorder %s72, %s86
      %p88 = scmp.eq.s32.totalorder %s27, 0
      %p89 = por %p87, %p88
      %s91 = sadd.s32 %s90, 1
      %p94 = scmp.eq.s32.totalorder %s21, 1
      %p95 = scmp.ne.s32.totalorder %s90, %s92
      %p96 = scmp.eq.s32.totalorder %s21, 0
      %p97 = por %p95, %p96
      %p98 = scmp.ne.s32.totalorder %s90, %s92
      %p99 = scmp.eq.s32.totalorder %s26, 1
      %p100 = por %p98, %p99
      %p101 = scmp.ne.s32.totalorder %s92, %s93
      %p102 = scmp.eq.s32.totalorder %s26, 0
      %p103 = por %p101, %p102
      %p104 = scmp.ne.s32.totalorder %s92, %s93
      %p105 = scmp.eq.s32.totalorder %s27, 1
      %p106 = por %p104, %p105
      %p108 = scmp.ne.s32.totalorder %s93, %s107
      %p109 = scmp.eq.s32.totalorder %s27, 0
      %p110 = por %p108, %p109
      %s112 = sadd.s32 %s111, 1
      %p115 = scmp.eq.s32.totalorder %s21, 1
      %p116 = scmp.ne.s32.totalorder %s111, %s113
      %p117 = scmp.eq.s32.totalorder %s21, 0
      %p118 = por %p116, %p117
      %p119 = scmp.ne.s32.totalorder %s111, %s113
      %p120 = scmp.eq.s32.totalorder %s26, 1
      %p121 = por %p119, %p120
      %p122 = scmp.ne.s32.totalorder %s113, %s114
      %p123 = scmp.eq.s32.totalorder %s26, 0
      %p124 = por %p122, %p123
      %p125 = scmp.ne.s32.totalorder %s113, %s114
      %p126 = scmp.eq.s32.totalorder %s27, 1
      %p127 = por %p125, %p126
      %p129 = scmp.ne.s32.totalorder %s114, %s128
      %p130 = scmp.eq.s32.totalorder %s27, 0
      %p131 = por %p129, %p130
      %s133 = sadd.s32 %s132, 1
      %p136 = scmp.eq.s32.totalorder %s21, 1
      %p137 = scmp.ne.s32.totalorder %s132, %s134
      %p138 = scmp.eq.s32.totalorder %s21, 0
      %p139 = por %p137, %p138
      %p140 = scmp.ne.s32.totalorder %s132, %s134
      %p141 = scmp.eq.s32.totalorder %s26, 1
      %p142 = por %p140, %p141
      %p143 = scmp.ne.s32.totalorder %s134, %s135
      %p144 = scmp.eq.s32.totalorder %s26, 0
      %p145 = por %p143, %p144
      %p146 = scmp.ne.s32.totalorder %s134, %s135
      %p147 = scmp.eq.s32.totalorder %s27, 1
      %p148 = por %p146, %p147
      %p150 = scmp.ne.s32.totalorder %s135, %s149
      %p151 = scmp.eq.s32.totalorder %s27, 0
      %p152 = por %p150, %p151
      %s153 = ssub.s32 %s28, %s40
      %p154 = scmp.eq.s32.totalorder %s153, 0
      %s156 = sadd.s32 %s155, 1
      %s157 = scalar_select %p154, %s155, %s156
      %p160 = pneg %p154
      %p161 = scmp.eq.s32.totalorder %s21, 1
      %p162 = por %p160, %p161
      %p163 = scmp.ne.s32.totalorder %s155, %s158
      %p164 = scmp.eq.s32.totalorder %s21, 0
      %p165 = por %p163, %p164
      %p166 = scmp.ne.s32.totalorder %s155, %s158
      %p167 = scmp.eq.s32.totalorder %s26, 1
      %p168 = por %p166, %p167
      %p169 = scmp.ne.s32.totalorder %s158, %s159
      %p170 = scmp.eq.s32.totalorder %s26, 0
      %p171 = por %p169, %p170
      %p172 = scmp.ne.s32.totalorder %s158, %s159
      %p173 = scmp.eq.s32.totalorder %s27, 1
      %p174 = por %p172, %p173
      %p176 = scmp.ne.s32.totalorder %s159, %s175
      %p177 = scmp.eq.s32.totalorder %s27, 0
      %p178 = por %p176, %p177
      %s179 = ssub.s32 %s28, %s40
      %p180 = scmp.eq.s32.totalorder %s179, 0
      %s182 = sadd.s32 %s181, 1
      %s183 = scalar_select %p180, %s181, %s182
      %p186 = pneg %p180
      %p187 = scmp.eq.s32.totalorder %s21, 1
      %p188 = por %p186, %p187
      %p189 = scmp.ne.s32.totalorder %s181, %s184
      %p190 = scmp.eq.s32.totalorder %s21, 0
      %p191 = por %p189, %p190
      %p192 = scmp.ne.s32.totalorder %s181, %s184
      %p193 = scmp.eq.s32.totalorder %s26, 1
      %p194 = por %p192, %p193
      %p195 = scmp.ne.s32.totalorder %s184, %s185
      %p196 = scmp.eq.s32.totalorder %s26, 0
      %p197 = por %p195, %p196
      %p198 = scmp.ne.s32.totalorder %s184, %s185
      %p199 = scmp.eq.s32.totalorder %s27, 1
      %p200 = por %p198, %p199
      %p202 = scmp.ne.s32.totalorder %s185, %s201
      %p203 = scmp.eq.s32.totalorder %s27, 0
      %p204 = por %p202, %p203
      %p205 = scmp.le.s32.totalorder 1, %s21
      %p206 = scmp.lt.s32.totalorder %s21, 3
      %p207 = pnand %p205, %p206
      %p208 = pneg %p207
      // Predicated region
      $region9: #{tpu_custom_call.1} parent=5 // pred_check
        _
      $region10: #{tpu_custom_call.1} parent=5 // pred_check_branch
        %210 = sbr.rel (%p207) target = $region12
      $region11: #{tpu_custom_call.1} parent=5 // pred_region
        %s211 = ssub.s32 %s21, 1
        // Predicated region
        $region13: #{tpu_custom_call.1} parent=11 // pred_check
          %p212 = pneg %p82
        $region14: #{tpu_custom_call.1} parent=11 // pred_check_branch
          %214 = sbr.rel (%p212) target = $region16
        $region15: #{tpu_custom_call.1} parent=11 // pred_region
          _
        $region16: #{tpu_custom_call.1} parent=11 // pred_fallthru
          _
        // Predicated region
        $region17: #{tpu_custom_call.1} parent=11 // pred_check
          %p215 = pneg %p103
        $region18: #{tpu_custom_call.1} parent=11 // pred_check_branch
          %217 = sbr.rel (%p215) target = $region20
        $region19: #{tpu_custom_call.1} parent=11 // pred_region
          _
        $region20: #{tpu_custom_call.1} parent=11 // pred_fallthru
          _
        // Predicated region
        $region21: #{tpu_custom_call.1} parent=11 // pred_check
          %p218 = pneg %p124
        $region22: #{tpu_custom_call.1} parent=11 // pred_check_branch
          %220 = sbr.rel (%p218) target = $region24
        $region23: #{tpu_custom_call.1} parent=11 // pred_region
          _
        $region24: #{tpu_custom_call.1} parent=11 // pred_fallthru
          _
        // Predicated region
        $region25: #{tpu_custom_call.1} parent=11 // pred_check
          %p221 = pneg %p145
        $region26: #{tpu_custom_call.1} parent=11 // pred_check_branch
          %223 = sbr.rel (%p221) target = $region28
        $region27: #{tpu_custom_call.1} parent=11 // pred_region
          _
        $region28: #{tpu_custom_call.1} parent=11 // pred_fallthru
          _
      $region12: #{tpu_custom_call.1} parent=5 // pred_fallthru
        _
      %p224 = scmp.lt.s32.totalorder %s21, 2
      // Predicated region
      $region29: #{tpu_custom_call.1} parent=5 // pred_check
        %p225 = pneg %p224
      $region30: #{tpu_custom_call.1} parent=5 // pred_check_branch
        %227 = sbr.rel (%p225) target = $region32
      $region31: #{tpu_custom_call.1} parent=5 // pred_region
        // Predicated region
        $region33: #{tpu_custom_call.1} parent=31 // pred_check
          %p228 = pneg %p55
        $region34: #{tpu_custom_call.1} parent=31 // pred_check_branch
          %230 = sbr.rel (%p228) target = $region36
        $region35: #{tpu_custom_call.1} parent=31 // pred_region
          %s231 = sand.u32 %s45, 1
          %s232 = scalar_lea.sflag [#allocation4], %s231
          %s233 = sand.u32 %s45, 1
          %s234 = smul.addr %s233, 32
          %s235 = scalar_lea.vmem [#allocation3], %s234
          %s236 = smul.u32 2, %s29
          %s238 = ssub.s32 512, 512
          %239 = vsyncadd %s232, %s238
          %s240 = smul.addr %s28, 4
          %s241 = sadd.s32 %s236, %s240
          %s242 = smul.addr %s241, 128
          %s243 = scalar_lea.hbm %s0, %s242
          %s244 = sshll.u32 %s235, 4
          %s245 = int_to_ptr.vmem [resolvable:$true] %s244
          %250 = dma.hbm_to_vmem [thread:$0]  %s243, 512, %s245, %s232, 256, 256, 16
        $region36: #{tpu_custom_call.1} parent=31 // pred_fallthru
          _
      $region32: #{tpu_custom_call.1} parent=5 // pred_fallthru
        _
      %p251 = scmp.le.s32.totalorder 1, %s21
      %p252 = scmp.lt.s32.totalorder %s21, 3
      %p253 = pnand %p251, %p252
      %p254 = pneg %p253
      // Predicated region
      $region37: #{tpu_custom_call.1} parent=5 // pred_check
        _
      $region38: #{tpu_custom_call.1} parent=5 // pred_check_branch
        %256 = sbr.rel (%p253) target = $region40
      $region39: #{tpu_custom_call.1} parent=5 // pred_region
        %s257 = ssub.s32 %s21, 1
        %s258 = sand.u32 %s48, 1
        %s259 = scalar_lea.sflag [#allocation4], %s258
        %s260 = sand.u32 %s48, 1
        %s261 = smul.addr %s260, 32
        %s262 = scalar_lea.vmem [#allocation3], %s261
        // Predicated region
        $region41: #{tpu_custom_call.1} parent=39 // pred_check
          %p263 = pneg %p61
        $region42: #{tpu_custom_call.1} parent=39 // pred_check_branch
          %265 = sbr.rel (%p263) target = $region44
        $region43: #{tpu_custom_call.1} parent=39 // pred_region
          %266 = dma.done %s259, 512
        $region44: #{tpu_custom_call.1} parent=39 // pred_fallthru
          _
        %s267 = sand.u32 %s48, 1
        %s268 = scalar_lea.sflag [#allocation4], %s267
        %s269 = sand.u32 %s48, 1
        %s270 = smul.addr %s269, 32
        %s271 = scalar_lea.vmem [#allocation3], %s270
        %p272 = pneg %p61
        %p273 = pneg %p58
        %p274 = pneg %p82
        %p275 = pneg %p79
        %p276 = pneg %p103
        %p277 = pneg %p100
        %p278 = pneg %p124
        %p279 = pneg %p121
        %p280 = pneg %p145
        %p281 = pneg %p142
        %p282 = pneg %p171
        %p283 = pneg %p168
        %s284 = sand.u32 %s158, 1
        %s285 = scalar_lea.sflag [#allocation5], %s284
        %s286 = sand.u32 %s158, 1
        %s287 = scalar_lea.vmem [#allocation6], %s286
        %p288 = pneg %p197
        %p289 = pneg %p194
        %p290 = scmp.lt.s32.totalorder %s30, 1
        %s291 = scalar_select %p290, %s30, 1
        %s292 = scalar_lea.vmem %s6, %s291
        %s293 = smul.u32 2, %s31
        %p294 = scmp.lt.s32.totalorder %s30, 1
        %s295 = scalar_select %p294, %s30, 1
        %s296 = scalar_lea.vmem %s6, %s295
        %p297 = scmp.eq.s32.totalorder %s31, 0
        // Predicated region
        $region45: #{tpu_custom_call.1} parent=39 // pred_check
          %p298 = pneg %p297
        $region46: #{tpu_custom_call.1} parent=39 // pred_check_branch
          %300 = sbr.rel (%p298) target = $region48
        $region47: #{tpu_custom_call.1} parent=39 // pred_region
          %vm301 = vcmask 122880
          %302 = vst.msk [vmem:[%s287] sm:$0x1] %vm301, 0.0
        $region48: #{tpu_custom_call.1} parent=39 // pred_fallthru
          _
        %v303 = vld [vmem:[%s262] sm:$0xff]
        %v304 = vld [vmem:[%s262 + $0x8] sm:$0xff]
        %v305 = vld [vmem:[%s262 + $0x10] sm:$0xff]
        %v306 = vld [vmem:[%s262 + $0x18] sm:$0xff]
        %v307 = vld [vmem:[%s287] sm:$0x1]
        %v308 = vadd.f32 %v303, %v304
        %309 = vadd.xlane.f32.xlu0 %v308
        %v310 = vpop.xlane.xlu0 %309
        %v311 = vadd.f32 %v305, %v306
        %312 = vadd.xlane.f32.xlu0 %v311
        %v313 = vpop.xlane.xlu0 %312
        %v316 = vlaneseq
        %v317 = vshrl.u32 %v316, 7
        %v318 = vsub.s32 0, %v317
        %v319 = vrot.slane %v310, %v318
        %v320 = vlaneseq
        %v321 = vshrl.u32 %v320, 7
        %v322 = vsub.s32 1, %v321
        %v323 = vrot.slane %v310, %v322
        %v324 = vlaneseq
        %v325 = vshrl.u32 %v324, 7
        %v326 = vsub.s32 2, %v325
        %v327 = vrot.slane %v310, %v326
        %v328 = vlaneseq
        %v329 = vshrl.u32 %v328, 7
        %v330 = vsub.s32 3, %v329
        %v331 = vrot.slane %v310, %v330
        %v332 = vlaneseq
        %v333 = vshrl.u32 %v332, 7
        %v334 = vsub.s32 4, %v333
        %v335 = vrot.slane %v310, %v334
        %v336 = vlaneseq
        %v337 = vshrl.u32 %v336, 7
        %v338 = vsub.s32 5, %v337
        %v339 = vrot.slane %v310, %v338
        %v340 = vlaneseq
        %v341 = vshrl.u32 %v340, 7
        %v342 = vsub.s32 6, %v341
        %v343 = vrot.slane %v310, %v342
        %v344 = vlaneseq
        %v345 = vshrl.u32 %v344, 7
        %v346 = vsub.s32 7, %v345
        %v347 = vrot.slane %v310, %v346
        %v348 = vlaneseq
        %v349 = vshrl.u32 %v348, 7
        %v350 = vsub.s32 0, %v349
        %v351 = vrot.slane %v313, %v350
        %v352 = vlaneseq
        %v353 = vshrl.u32 %v352, 7
        %v354 = vsub.s32 1, %v353
        %v355 = vrot.slane %v313, %v354
        %v356 = vlaneseq
        %v357 = vshrl.u32 %v356, 7
        %v358 = vsub.s32 2, %v357
        %v359 = vrot.slane %v313, %v358
        %v360 = vlaneseq
        %v361 = vshrl.u32 %v360, 7
        %v362 = vsub.s32 3, %v361
        %v363 = vrot.slane %v313, %v362
        %v364 = vlaneseq
        %v365 = vshrl.u32 %v364, 7
        %v366 = vsub.s32 4, %v365
        %v367 = vrot.slane %v313, %v366
        %v368 = vlaneseq
        %v369 = vshrl.u32 %v368, 7
        %v370 = vsub.s32 5, %v369
        %v371 = vrot.slane %v313, %v370
        %v372 = vlaneseq
        %v373 = vshrl.u32 %v372, 7
        %v374 = vsub.s32 6, %v373
        %v375 = vrot.slane %v313, %v374
        %v376 = vlaneseq
        %v377 = vshrl.u32 %v376, 7
        %v378 = vsub.s32 7, %v377
        %v379 = vrot.slane %v313, %v378
        %v380 = vcombine.low %v319, %v323
        %v381 = vcombine.low %v327, %v331
        %v382 = vcombine.low %v335, %v339
        %v383 = vcombine.low %v343, %v347
        %v385 = vunpack.c.l.s4 1966171168
        %v386 = vunpack.c.0.s8 %v385
        %v387 = vlaneseq
        %v388 = vshrl.u32 %v387, 7
        %v389 = vsub.s32 %v386, %v388
        %v390 = vrot.slane %v380, %v389
        %v392 = vunpack.c.l.s4 1966171168
        %v393 = vunpack.c.0.s8 %v392
        %v394 = vlaneseq
        %v395 = vshrl.u32 %v394, 7
        %v396 = vsub.s32 %v393, %v395
        %v397 = vrot.slane %v381, %v396
        %v399 = vunpack.c.l.s4 1966171168
        %v400 = vunpack.c.0.s8 %v399
        %v401 = vlaneseq
        %v402 = vshrl.u32 %v401, 7
        %v403 = vsub.s32 %v400, %v402
        %v404 = vrot.slane %v382, %v403
        %v406 = vunpack.c.l.s4 1966171168
        %v407 = vunpack.c.0.s8 %v406
        %v408 = vlaneseq
        %v409 = vshrl.u32 %v408, 7
        %v410 = vsub.s32 %v407, %v409
        %v411 = vrot.slane %v383, %v410
        %v412 = vcombine.low %v390, %v397
        %v413 = vcombine.low %v404, %v411
        %v415 = vunpack.c.l.s4 1966171168
        %v416 = vunpack.c.0.s8 %v415
        %v417 = vlaneseq
        %v418 = vshrl.u32 %v417, 7
        %v419 = vsub.s32 %v416, %v418
        %v420 = vrot.slane %v412, %v419
        %v422 = vunpack.c.l.s4 1966171168
        %v423 = vunpack.c.0.s8 %v422
        %v424 = vlaneseq
        %v425 = vshrl.u32 %v424, 7
        %v426 = vsub.s32 %v423, %v425
        %v427 = vrot.slane %v413, %v426
        %v428 = vcombine.low %v420, %v427
        %v429 = vcombine.low %v351, %v355
        %v430 = vcombine.low %v359, %v363
        %v431 = vcombine.low %v367, %v371
        %v432 = vcombine.low %v375, %v379
        %v434 = vunpack.c.l.s4 1966171168
        %v435 = vunpack.c.0.s8 %v434
        %v436 = vlaneseq
        %v437 = vshrl.u32 %v436, 7
        %v438 = vsub.s32 %v435, %v437
        %v439 = vrot.slane %v429, %v438
        %v441 = vunpack.c.l.s4 1966171168
        %v442 = vunpack.c.0.s8 %v441
        %v443 = vlaneseq
        %v444 = vshrl.u32 %v443, 7
        %v445 = vsub.s32 %v442, %v444
        %v446 = vrot.slane %v430, %v445
        %v448 = vunpack.c.l.s4 1966171168
        %v449 = vunpack.c.0.s8 %v448
        %v450 = vlaneseq
        %v451 = vshrl.u32 %v450, 7
        %v452 = vsub.s32 %v449, %v451
        %v453 = vrot.slane %v431, %v452
        %v455 = vunpack.c.l.s4 1966171168
        %v456 = vunpack.c.0.s8 %v455
        %v457 = vlaneseq
        %v458 = vshrl.u32 %v457, 7
        %v459 = vsub.s32 %v456, %v458
        %v460 = vrot.slane %v432, %v459
        %v461 = vcombine.low %v439, %v446
        %v462 = vcombine.low %v453, %v460
        %v464 = vunpack.c.l.s4 1966171168
        %v465 = vunpack.c.0.s8 %v464
        %v466 = vlaneseq
        %v467 = vshrl.u32 %v466, 7
        %v468 = vsub.s32 %v465, %v467
        %v469 = vrot.slane %v461, %v468
        %v471 = vunpack.c.l.s4 1966171168
        %v472 = vunpack.c.0.s8 %v471
        %v473 = vlaneseq
        %v474 = vshrl.u32 %v473, 7
        %v475 = vsub.s32 %v472, %v474
        %v476 = vrot.slane %v462, %v475
        %v477 = vcombine.low %v469, %v476
        %478 = vset.pattern.permute.xlu0 0
        %479 = vperm.xlu0 %478, %v428
        %v480 = vpop.permute.xlu0 %479
        %481 = vset.pattern.permute.xlu0 0
        %482 = vperm.xlu0 %481, %v477
        %v483 = vpop.permute.xlu0 %482
        %v484 = vlaneseq
        %v485 = vand.u32 %v484, 127
        %v486 = vlaneseq
        %v487 = vshrl.u32 %v486, 7
        %v488 = vsub.s32 %v485, %v487
        %v489 = vrot.slane %v480, %v488
        %v490 = vadd.s32 %v485, 4294967288
        %v491 = vlaneseq
        %v492 = vshrl.u32 %v491, 7
        %v493 = vsub.s32 %v490, %v492
        %v494 = vrot.slane %v483, %v493
        %vm495 = vcmask 130112
        %v496 = vsel %vm495, %v494, %v489
        %v498 = vunpack.c.l.s4 1966171168
        %v499 = vunpack.c.0.s8 %v498
        %v500 = vlaneseq
        %v501 = vshrl.u32 %v500, 7
        %v502 = vsub.s32 %v499, %v501
        %v503 = vrot.slane %v496, %v502
        %v505 = vunpack.c.l.s4 1966171168
        %v506 = vunpack.c.0.s8 %v505
        %v507 = vlaneseq
        %v508 = vshrl.u32 %v507, 7
        %v509 = vsub.s32 %v506, %v508
        %v510 = vrot.slane %v503, %v509
        %v512 = vadd.f32 %v307, %v510
        %vm513 = vcmask 122880
        %514 = vst.msk [vmem:[%s287] sm:$0x1] %vm513, %v512
        // Predicated region
        $region49: #{tpu_custom_call.1} parent=39 // pred_check
          %p515 = pneg %p297
        $region50: #{tpu_custom_call.1} parent=39 // pred_check_branch
          %517 = sbr.rel (%p515) target = $region52
        $region51: #{tpu_custom_call.1} parent=39 // pred_region
          %v518 = vld [vmem:[%s287] sm:$0x1]
          %v519 = vmul.f32 %v518, 0.00390625
          %520 = vst.msk [vmem:[%s287] sm:$0x1] %vm513, %v519
          %v521 = vld [vmem:[%s1] sm:$0xff]
          %v522 = vld [vmem:[%s1 + $0x8] sm:$0xff]
          %v523 = vld [vmem:[%s2] sm:$0x1]
          %vm524 = vcmask 130048
          %v526 = vsel %vm524, %v519, 0
          %528 = vmatprep.subr.mxu0 0.0
          %529 = vmatpush1.msra.mxu0 %v521
          %530 = vmatprep.subr.mxu0 0.0
          %531 = vmatpush1.msra.mxu0 %v522
          %532 = vmatprep.subr.mxu0 0.0
          %533 = vmatpush1.msra.mxu0 0.0
          %534 = vmatprep.subr.mxu0 0.0
          %535 = vmatpush1.msra.mxu0 0.0
          %536 = vmatprep.subr.mxu0 0.0
          %537 = vmatpush1.msra.mxu0 0.0
          %538 = vmatprep.subr.mxu0 0.0
          %539 = vmatpush1.msra.mxu0 0.0
          %540 = vmatprep.subr.mxu0 0.0
          %541 = vmatpush1.msra.mxu0 0.0
          %542 = vmatprep.subr.mxu0 0.0
          %543 = vmatpush1.msra.mxu0 0.0
          %544 = vmatprep.subr.mxu0 0.0
          %545 = vmatpush1.msra.mxu0 0.0
          %546 = vmatprep.subr.mxu0 0.0
          %547 = vmatpush1.msra.mxu0 0.0
          %548 = vmatprep.subr.mxu0 0.0
          %549 = vmatpush1.msra.mxu0 0.0
          %550 = vmatprep.subr.mxu0 0.0
          %551 = vmatpush1.msra.mxu0 0.0
          %552 = vmatprep.subr.mxu0 0.0
          %553 = vmatpush1.msra.mxu0 0.0
          %554 = vmatprep.subr.mxu0 0.0
          %555 = vmatpush1.msra.mxu0 0.0
          %556 = vmatprep.subr.mxu0 0.0
          %557 = vmatpush1.msra.mxu0 0.0
          %558 = vmatprep.subr.mxu0 0.0
          %559 = vmatpush1.msra.mxu0 0.0
          %560 = vmatprep.subr.mxu0 0.0
          %561 = vmatpush1.msra.mxu0 0.0
          %562 = vmatprep.subr.mxu0 0.0
          %563 = vmatpush1.msra.mxu0 0.0
          %564 = vmatprep.subr.mxu0 0.0
          %565 = vmatpush1.msra.mxu0 0.0
          %566 = vmatprep.subr.mxu0 0.0
          %567 = vmatpush1.msra.mxu0 0.0
          %568 = vmatprep.subr.mxu0 0.0
          %569 = vmatpush1.msra.mxu0 0.0
          %570 = vmatprep.subr.mxu0 0.0
          %571 = vmatpush1.msra.mxu0 0.0
          %572 = vmatprep.subr.mxu0 0.0
          %573 = vmatpush1.msra.mxu0 0.0
          %574 = vmatprep.subr.mxu0 0.0
          %575 = vmatpush1.msra.mxu0 0.0
          %576 = vmatprep.subr.mxu0 0.0
          %577 = vmatpush1.msra.mxu0 0.0
          %578 = vmatprep.subr.mxu0 0.0
          %579 = vmatpush1.msra.mxu0 0.0
          %580 = vmatprep.subr.mxu0 0.0
          %581 = vmatpush1.msra.mxu0 0.0
          %582 = vmatprep.subr.mxu0 0.0
          %583 = vmatpush1.msra.mxu0 0.0
          %584 = vmatprep.subr.mxu0 0.0
          %585 = vmatpush1.msra.mxu0 0.0
          %586 = vmatprep.subr.mxu0 0.0
          %587 = vmatpush1.msra.mxu0 0.0
          %588 = vmatprep.subr.mxu0 0.0
          %589 = vmatpush1.msra.mxu0 0.0
          %590 = vmatprep.subr.mxu0 0.0
          %591 = vmatpush1.msra.mxu0 0.0
          %592 = vmatprep.mubr.f32.mxu0 0.0
          %593 = vmatmul.mubr.f32.gmra.mrb[0].mxu0 %v526
          %v594 = vpop.f32.mrb[0].mxu0
          %v595 = vadd.f32 %v523, %v594
          %v596 = vpop.f32.mrb[0].mxu0
          %597 = vdwg.mxu0
          %v598 = vtanh.pop %v595
          %v599 = vxor.u32 %v595, 2147483648
          %v600 = vmul.f32 %v599, 1.442695
          %v601 = vpow.pop %v600
          %v602 = vadd.f32 %v601, 1.0
          %v603 = vrcp.pop %v602
          %v604 = vmul.f32 1.0, %v603
          %606 = vrot.lane.b32.xlu0 %v604, 96
          %v607 = vpop.permute.xlu0 %606
          %v609 = vmul.f32 %v598, %v607
          %v610 = vld [vmem:[%s3] sm:$0xff]
          %v611 = vld [vmem:[%s3 + $0x8] sm:$0xff]
          %v612 = vld [vmem:[%s3 + $0x10] sm:$0xff]
          %v613 = vld [vmem:[%s3 + $0x18] sm:$0xff]
          %v614 = vld [vmem:[#allocation2] sm:$0x1]
          %vm615 = vcmask 261120
          %v617 = vsel %vm615, %v609, 0
          %619 = vmatprep.subr.mxu0 0.0
          %620 = vmatpush1.msra.mxu0 %v610
          %621 = vmatprep.subr.mxu0 0.0
          %622 = vmatpush1.msra.mxu0 %v611
          %623 = vmatprep.subr.mxu0 0.0
          %624 = vmatpush1.msra.mxu0 %v612
          %625 = vmatprep.subr.mxu0 0.0
          %626 = vmatpush1.msra.mxu0 %v613
          %627 = vmatprep.subr.mxu0 0.0
          %628 = vmatpush1.msra.mxu0 0.0
          %629 = vmatprep.subr.mxu0 0.0
          %630 = vmatpush1.msra.mxu0 0.0
          %631 = vmatprep.subr.mxu0 0.0
          %632 = vmatpush1.msra.mxu0 0.0
          %633 = vmatprep.subr.mxu0 0.0
          %634 = vmatpush1.msra.mxu0 0.0
          %635 = vmatprep.subr.mxu0 0.0
          %636 = vmatpush1.msra.mxu0 0.0
          %637 = vmatprep.subr.mxu0 0.0
          %638 = vmatpush1.msra.mxu0 0.0
          %639 = vmatprep.subr.mxu0 0.0
          %640 = vmatpush1.msra.mxu0 0.0
          %641 = vmatprep.subr.mxu0 0.0
          %642 = vmatpush1.msra.mxu0 0.0
          %643 = vmatprep.subr.mxu0 0.0
          %644 = vmatpush1.msra.mxu0 0.0
          %645 = vmatprep.subr.mxu0 0.0
          %646 = vmatpush1.msra.mxu0 0.0
          %647 = vmatprep.subr.mxu0 0.0
          %648 = vmatpush1.msra.mxu0 0.0
          %649 = vmatprep.subr.mxu0 0.0
          %650 = vmatpush1.msra.mxu0 0.0
          %651 = vmatprep.subr.mxu0 0.0
          %652 = vmatpush1.msra.mxu0 0.0
          %653 = vmatprep.subr.mxu0 0.0
          %654 = vmatpush1.msra.mxu0 0.0
          %655 = vmatprep.subr.mxu0 0.0
          %656 = vmatpush1.msra.mxu0 0.0
          %657 = vmatprep.subr.mxu0 0.0
          %658 = vmatpush1.msra.mxu0 0.0
          %659 = vmatprep.subr.mxu0 0.0
          %660 = vmatpush1.msra.mxu0 0.0
          %661 = vmatprep.subr.mxu0 0.0
          %662 = vmatpush1.msra.mxu0 0.0
          %663 = vmatprep.subr.mxu0 0.0
          %664 = vmatpush1.msra.mxu0 0.0
          %665 = vmatprep.subr.mxu0 0.0
          %666 = vmatpush1.msra.mxu0 0.0
          %667 = vmatprep.subr.mxu0 0.0
          %668 = vmatpush1.msra.mxu0 0.0
          %669 = vmatprep.subr.mxu0 0.0
          %670 = vmatpush1.msra.mxu0 0.0
          %671 = vmatprep.subr.mxu0 0.0
          %672 = vmatpush1.msra.mxu0 0.0
          %673 = vmatprep.subr.mxu0 0.0
          %674 = vmatpush1.msra.mxu0 0.0
          %675 = vmatprep.subr.mxu0 0.0
          %676 = vmatpush1.msra.mxu0 0.0
          %677 = vmatprep.subr.mxu0 0.0
          %678 = vmatpush1.msra.mxu0 0.0
          %679 = vmatprep.subr.mxu0 0.0
          %680 = vmatpush1.msra.mxu0 0.0
          %681 = vmatprep.subr.mxu0 0.0
          %682 = vmatpush1.msra.mxu0 0.0
          %683 = vmatprep.mubr.f32.mxu0 0.0
          %684 = vmatmul.mubr.f32.gmra.mrb[0].mxu0 %v617
          %v685 = vpop.f32.mrb[0].mxu0
          %v686 = vadd.f32 %v614, %v685
          %v687 = vpop.f32.mrb[0].mxu0
          %688 = vdwg.mxu0
          %vm689 = vcmask 0
          %690 = vst.msk [vmem:[%s296] sm:$0x1] %vm689, %v686
        $region52: #{tpu_custom_call.1} parent=39 // pred_fallthru
          _
        %s691 = sand.u32 %s158, 1
        %s692 = scalar_lea.sflag [#allocation5], %s691
        %s693 = sand.u32 %s158, 1
        %s694 = scalar_lea.vmem [#allocation6], %s693
        %p695 = scmp.lt.s32.totalorder %s30, 1
        %s696 = scalar_select %p695, %s30, 1
        %s697 = scalar_lea.vmem %s6, %s696
        // Predicated region
        $region53: #{tpu_custom_call.1} parent=39 // pred_check
          %p698 = pneg %p168
        $region54: #{tpu_custom_call.1} parent=39 // pred_check_branch
          %700 = sbr.rel (%p698) target = $region56
        $region55: #{tpu_custom_call.1} parent=39 // pred_region
          %s702 = ssub.s32 16, 16
          %703 = vsyncadd %s692, %s702
          %s704 = smul.addr %s30, 16
          %s705 = scalar_lea.hbm %s5, %s704
          %s707 = sshll.u32 %s694, 4
          %s708 = int_to_ptr.vmem [resolvable:$true] %s707
          %710 = dma.vmem_to_hbm [thread:$0]  %s708, 16, %s705, %s692
        $region56: #{tpu_custom_call.1} parent=39 // pred_fallthru
          _
        // Predicated region
        $region57: #{tpu_custom_call.1} parent=39 // pred_check
          %p711 = pneg %p194
        $region58: #{tpu_custom_call.1} parent=39 // pred_check_branch
          %713 = sbr.rel (%p711) target = $region60
        $region59: #{tpu_custom_call.1} parent=39 // pred_region
          _
        $region60: #{tpu_custom_call.1} parent=39 // pred_fallthru
          _
      $region40: #{tpu_custom_call.1} parent=5 // pred_fallthru
        _
      %p714 = scmp.le.s32.totalorder 2, %s21
      // Predicated region
      $region61: #{tpu_custom_call.1} parent=5 // pred_check
        %p715 = pneg %p714
      $region62: #{tpu_custom_call.1} parent=5 // pred_check_branch
        %717 = sbr.rel (%p715) target = $region64
      $region63: #{tpu_custom_call.1} parent=5 // pred_region
        %s718 = ssub.s32 %s21, 2
        // Predicated region
        $region65: #{tpu_custom_call.1} parent=63 // pred_check
          %p719 = pneg %p174
        $region66: #{tpu_custom_call.1} parent=63 // pred_check_branch
          %721 = sbr.rel (%p719) target = $region68
        $region67: #{tpu_custom_call.1} parent=63 // pred_region
          %s722 = sand.u32 %s159, 1
          %s723 = scalar_lea.sflag [#allocation5], %s722
          %s724 = sand.u32 %s159, 1
          %s725 = scalar_lea.vmem [#allocation6], %s724
          %726 = dma.done %s723, 16
        $region68: #{tpu_custom_call.1} parent=63 // pred_fallthru
          _
        // Predicated region
        $region69: #{tpu_custom_call.1} parent=63 // pred_check
          %p727 = pneg %p200
        $region70: #{tpu_custom_call.1} parent=63 // pred_check_branch
          %729 = sbr.rel (%p727) target = $region72
        $region71: #{tpu_custom_call.1} parent=63 // pred_region
          %p730 = scmp.lt.s32.totalorder %s32, 1
          %s731 = scalar_select %p730, %s32, 1
          %s732 = scalar_lea.vmem %s6, %s731
        $region72: #{tpu_custom_call.1} parent=63 // pred_fallthru
          _
      $region64: #{tpu_custom_call.1} parent=5 // pred_fallthru
        _
    $region6: #{tpu_custom_call.1} parent=1 // loop_footer
      %s25 = sadd.s32 1, %s21
    $region7: #{tpu_custom_call.1} parent=1 // loop_footer_branch
      %20 = sbr.rel target = $region3
    $region8: #{tpu_custom_call.1} parent=1 // loop_exit
      _
    %733 = vsyncpa [#allocation4], 1
    %s734 = scalar_lea.sflag [#allocation4], 1
    %735 = vsyncpa %s734, 1
    %736 = vsyncpa [#allocation5], 1
    %s737 = scalar_lea.sflag [#allocation5], 1
    %738 = vsyncpa %s737, 1

</llo_original>
